<compile_context>
chip_gen: v7x
topology: tpu7x:2x2x1
jax: 0.10.0
libtpu: 0.0.40
codegen_flags: <defaults>
</compile_context>

<pallas_src>
import functools

import jax
import jax.numpy as jnp
from jax.experimental import pallas as pl
from jax.experimental.pallas import tpu as pltpu


def _round_up(n: int, m: int) -> int:
    return ((n + m - 1) // m) * m


def _block_diag(w, pack):
    """blockdiag(w, ..., w) with `pack` copies (tiny; weights are small)."""
    if pack == 1:
        return w
    return jnp.kron(jnp.eye(pack, dtype=w.dtype), w)


def _mlp_kernel(x_ref, w1_ref, b1_ref, w2_ref, b2_ref, w3_ref, b3_ref, o_ref):
    # x tile: (block_rows, pack*D) f32 -> bf16 cast in-kernel (saves a wrapper-side HBM pass).
    x = x_ref[...].astype(jnp.bfloat16)
    # Layer 1 (block-diagonal): bf16 MXU, f32 accumulate; bias + ReLU on lane-dense rows.
    h1 = jnp.dot(x, w1_ref[...], preferred_element_type=jnp.float32)
    h1 = jnp.maximum(h1 + b1_ref[...], 0.0)
    # Layer 2 (block-diagonal).
    h2 = jnp.dot(h1.astype(jnp.bfloat16), w2_ref[...], preferred_element_type=jnp.float32)
    h2 = jnp.maximum(h2 + b2_ref[...], 0.0)
    # Layer 3: block-diagonal (pack*H2, pack) column stack -> per-row scalar, written straight into
    # the packed (block_rows, pack) output layout (flat row-major == batch order); no XLU
    # reduce / relayout on the store path.
    out = jnp.dot(h2.astype(jnp.bfloat16), w3_ref[...], preferred_element_type=jnp.float32)
    o_ref[...] = (out + b3_ref[...]).astype(o_ref.dtype)
    # TODO(synk): training-mode dropout (p=0.3) omitted (inference only); would use
    # pltpu.prng_seed + pltpu.prng_random_bits for a keep-mask.


@functools.partial(jax.jit, static_argnames=("block_b",))
def content_based_forward(x, params, block_b=8192):
    """x: (B, input_dim) float32 -> (B,) float32  (matches .squeeze(-1))."""
    w1, b1, w2, b2, w3, b3 = params
    B, D = x.shape
    H = w1.shape[1]
    H2 = w2.shape[1]

    # Pack `pack` rows per lane-row so feature dims < 128 still fill the 128-lane vregs.
    pack = max(1, min(8, 128 // max(D, 1)))

    # Pad only to a multiple of `pack` (usually a no-op); ragged grid tiles handle the rest.
    B_pad = _round_up(B, pack)
    if B_pad != B:
        # TODO(synk): this pad costs one extra HBM pass over x; only triggers when B % pack != 0.
        x = jnp.pad(x, ((0, B_pad - B), (0, 0)))
    rows = B_pad // pack
    pD, pH, pH2 = pack * D, pack * H, pack * H2

    # Free row-major view: (B_pad, D) -> (rows, pack*D).
    x_packed = x.reshape(rows, pD)

    # --- batch tiling --------------------------------------------------------------------------
    # Keep the f32 x tile <= ~4 MiB so double-buffering fits every generation's scoped-VMEM default.
    max_block_rows = max(8, (4 * 1024 * 1024) // (4 * pD))
    block_rows = max(8, min(_round_up(max(block_b, pack) // pack, 8), max_block_rows))
    # v7x has 2 TensorCores: ensure the ("parallel",) grid has >= 2 steps when the batch allows it.
    if rows < 2 * block_rows and rows >= 256:
        block_rows = _round_up(-(-rows // 2), 128)
    if block_rows >= rows:
        block_rows = rows                      # single full-extent block (always a legal block dim)
    num_tiles = -(-rows // block_rows)

    # --- weights: block-diagonal packing, bf16 for the MXU, f32 biases ---------------------------
    f32 = jnp.float32
    w1_blk = _block_diag(w1.astype(f32), pack).astype(jnp.bfloat16)                   # (pD, pH)
    w2_blk = _block_diag(w2.astype(f32), pack).astype(jnp.bfloat16)                   # (pH, pH2)
    w3_blk = _block_diag(w3.reshape(H2, 1).astype(f32), pack).astype(jnp.bfloat16)    # (pH2, pack)
    b1_t = jnp.tile(b1.reshape(1, H).astype(f32), (1, pack))                          # (1, pH)
    b2_t = jnp.tile(b2.reshape(1, H2).astype(f32), (1, pack))                         # (1, pH2)
    b3_t = jnp.tile(b3.reshape(1, 1).astype(f32), (1, pack))                          # (1, pack)

    cost = pl.CostEstimate(
        flops=2 * rows * (pD * pH + pH * pH2 + pH2 * pack),
        transcendentals=0,
        bytes_accessed=4 * rows * pD                          # f32 x streamed once
        + 2 * (pD * pH + pH * pH2 + pH2 * pack)               # bf16 block-diag weights
        + 4 * (pH + pH2 + pack)                               # f32 biases
        + 4 * rows * pack,                                    # f32 output
    )

    out2d = pl.pallas_call(
        _mlp_kernel,
        out_shape=jax.ShapeDtypeStruct((rows, pack), jnp.float32),
        grid_spec=pltpu.PrefetchScalarGridSpec(
            num_scalar_prefetch=0,
            grid=(num_tiles,),
            in_specs=[
                pl.BlockSpec((block_rows, pD), lambda i: (i, 0)),   # packed x tile (streamed)
                pl.BlockSpec((pD, pH), lambda i: (0, 0)),           # blockdiag(w1)  (grid-invariant)
                pl.BlockSpec((1, pH), lambda i: (0, 0)),            # tiled b1
                pl.BlockSpec((pH, pH2), lambda i: (0, 0)),          # blockdiag(w2)
                pl.BlockSpec((1, pH2), lambda i: (0, 0)),           # tiled b2
                pl.BlockSpec((pH2, pack), lambda i: (0, 0)),        # blockdiag(w3)
                pl.BlockSpec((1, pack), lambda i: (0, 0)),          # tiled b3
            ],
            out_specs=pl.BlockSpec((block_rows, pack), lambda i: (i, 0)),
        ),
        compiler_params=pltpu.CompilerParams(
            dimension_semantics=("parallel",),
        ),
        cost_estimate=cost,
    )(x_packed, w1_blk, b1_t, w2_blk, b2_t, w3_blk, b3_t)

    out = out2d.reshape(-1)      # (B_pad,): free view, packed row-major order == batch order
    return out if B_pad == B else out[:B]


def init_params(key, input_dim, hidden_dim=32):
    """Deterministic PyTorch-style (Kaiming-uniform-ish) Linear init."""
    h2 = hidden_dim // 2
    ks = jax.random.split(key, 6)

    def lin(kw, kb, fan_in, fan_out):
        bound = 1.0 / jnp.sqrt(fan_in)
        w = jax.random.uniform(kw, (fan_in, fan_out), jnp.float32, -bound, bound)
        b = jax.random.uniform(kb, (1, fan_out), jnp.float32, -bound, bound)
        return w, b

    w1, b1 = lin(ks[0], ks[1], input_dim, hidden_dim)
    w2, b2 = lin(ks[2], ks[3], hidden_dim, h2)
    w3, b3 = lin(ks[4], ks[5], h2, 1)
    return (w1, b1, w2, b2, w3, b3)


def reference_forward(x, params):
    """Pure-JAX reference with the same bf16 quantization of x/w1/h1/w2/h2/w3 as the kernel."""
    w1, b1, w2, b2, w3, b3 = params
    hi = jax.lax.Precision.HIGHEST
    f32 = jnp.float32
    q = lambda a: a.astype(jnp.bfloat16).astype(f32)
    h1 = jnp.maximum(jnp.dot(q(x), q(w1), precision=hi) + b1, 0.0)
    h2 = jnp.maximum(jnp.dot(q(h1), q(w2), precision=hi) + b2, 0.0)
    out = jnp.dot(q(h2), q(w3), precision=hi) + b3
    return out[:, 0]


if __name__ == "__main__":
    key = jax.random.PRNGKey(0)
    k_x, k_p = jax.random.split(key)

    # Small, module-consistent shapes; batch=200 with pack=4 -> packed view (50, 128), no padding.
    batch, input_dim, hidden_dim = 200, 32, 32   # hidden//2 = 16
    x = jax.random.normal(k_x, (batch, input_dim), jnp.float32)
    params = init_params(k_p, input_dim, hidden_dim)

    out = jax.block_until_ready(content_based_forward(x, params))
    ref = reference_forward(x, params)

    assert out.shape == (batch,), out.shape
    assert jnp.allclose(out, ref, atol=1e-3, rtol=1e-3), (out, ref)
    print("KERNEL_OK")
</pallas_src>

<mosaic_0001>
module attributes {stable_mosaic.version = 11 : i64} {
  func.func @_mlp_kernel(%arg0: i32, %arg1: memref<50x128xf32, #tpu.memory_space<vmem>>, %arg2: memref<128x128xbf16, #tpu.memory_space<vmem>>, %arg3: memref<1x128xf32, #tpu.memory_space<vmem>>, %arg4: memref<128x64xbf16, #tpu.memory_space<vmem>>, %arg5: memref<1x64xf32, #tpu.memory_space<vmem>>, %arg6: memref<64x4xbf16, #tpu.memory_space<vmem>>, %arg7: memref<1x4xf32, #tpu.memory_space<vmem>>, %arg8: memref<50x4xf32, #tpu.memory_space<vmem>>) attributes {dimension_semantics = [#tpu.dimension_semantics<parallel>], iteration_bounds = array<i64: 1>, scalar_prefetch = 0 : i64, scratch_operands = 0 : i64, tpu.core_type = #tpu.core_type<tc>, window_params = [{transform_indices = @transform_0, window_bounds = array<i64: 50, 128>}, {pipeline_mode = #tpu.pipeline_mode<synchronous>, transform_indices = @transform_1, window_bounds = array<i64: 128, 128>}, {pipeline_mode = #tpu.pipeline_mode<synchronous>, transform_indices = @transform_2, window_bounds = array<i64: 1, 128>}, {pipeline_mode = #tpu.pipeline_mode<synchronous>, transform_indices = @transform_3, window_bounds = array<i64: 128, 64>}, {pipeline_mode = #tpu.pipeline_mode<synchronous>, transform_indices = @transform_4, window_bounds = array<i64: 1, 64>}, {pipeline_mode = #tpu.pipeline_mode<synchronous>, transform_indices = @transform_5, window_bounds = array<i64: 64, 4>}, {pipeline_mode = #tpu.pipeline_mode<synchronous>, transform_indices = @transform_6, window_bounds = array<i64: 1, 4>}, {transform_indices = @transform_7, window_bounds = array<i64: 50, 4>}]} {
    %c0 = arith.constant 0 : index
    %c0_0 = arith.constant 0 : index
    %0 = vector.load %arg1[%c0, %c0_0] : memref<50x128xf32, #tpu.memory_space<vmem>>, vector<50x128xf32>
    %1 = arith.truncf %0 : vector<50x128xf32> to vector<50x128xbf16>
    %c0_1 = arith.constant 0 : index
    %c0_2 = arith.constant 0 : index
    %2 = vector.load %arg2[%c0_1, %c0_2] : memref<128x128xbf16, #tpu.memory_space<vmem>>, vector<128x128xbf16>
    %cst = arith.constant dense<0.000000e+00> : vector<50x128xf32>
    %3 = tpu.matmul %1, %2, %cst {dimension_numbers = #tpu.dot_dimension_numbers<[1], [0], [0], [1], [0, 0, 1, 1], [], []>} : vector<50x128xbf16>, vector<128x128xbf16>, vector<50x128xf32> -> vector<50x128xf32>
    %c0_3 = arith.constant 0 : index
    %c0_4 = arith.constant 0 : index
    %4 = vector.load %arg3[%c0_3, %c0_4] : memref<1x128xf32, #tpu.memory_space<vmem>>, vector<1x128xf32>
    %5 = vector.broadcast %4 : vector<1x128xf32> to vector<50x128xf32>
    %6 = arith.addf %3, %5 : vector<50x128xf32>
    %cst_5 = arith.constant 0.000000e+00 : f32
    %7 = vector.broadcast %cst_5 : f32 to vector<50x128xf32>
    %8 = arith.maximumf %6, %7 : vector<50x128xf32>
    %9 = arith.truncf %8 : vector<50x128xf32> to vector<50x128xbf16>
    %c0_6 = arith.constant 0 : index
    %c0_7 = arith.constant 0 : index
    %10 = vector.load %arg4[%c0_6, %c0_7] : memref<128x64xbf16, #tpu.memory_space<vmem>>, vector<128x64xbf16>
    %cst_8 = arith.constant dense<0.000000e+00> : vector<50x64xf32>
    %11 = tpu.matmul %9, %10, %cst_8 {dimension_numbers = #tpu.dot_dimension_numbers<[1], [0], [0], [1], [0, 0, 1, 1], [], []>} : vector<50x128xbf16>, vector<128x64xbf16>, vector<50x64xf32> -> vector<50x64xf32>
    %c0_9 = arith.constant 0 : index
    %c0_10 = arith.constant 0 : index
    %12 = vector.load %arg5[%c0_9, %c0_10] : memref<1x64xf32, #tpu.memory_space<vmem>>, vector<1x64xf32>
    %13 = vector.broadcast %12 : vector<1x64xf32> to vector<50x64xf32>
    %14 = arith.addf %11, %13 : vector<50x64xf32>
    %cst_11 = arith.constant 0.000000e+00 : f32
    %15 = vector.broadcast %cst_11 : f32 to vector<50x64xf32>
    %16 = arith.maximumf %14, %15 : vector<50x64xf32>
    %17 = arith.truncf %16 : vector<50x64xf32> to vector<50x64xbf16>
    %c0_12 = arith.constant 0 : index
    %c0_13 = arith.constant 0 : index
    %18 = vector.load %arg6[%c0_12, %c0_13] : memref<64x4xbf16, #tpu.memory_space<vmem>>, vector<64x4xbf16>
    %cst_14 = arith.constant dense<0.000000e+00> : vector<50x4xf32>
    %19 = tpu.matmul %17, %18, %cst_14 {dimension_numbers = #tpu.dot_dimension_numbers<[1], [0], [0], [1], [0, 0, 1, 1], [], []>} : vector<50x64xbf16>, vector<64x4xbf16>, vector<50x4xf32> -> vector<50x4xf32>
    %c0_15 = arith.constant 0 : index
    %c0_16 = arith.constant 0 : index
    %20 = vector.load %arg7[%c0_15, %c0_16] : memref<1x4xf32, #tpu.memory_space<vmem>>, vector<1x4xf32>
    %21 = vector.broadcast %20 : vector<1x4xf32> to vector<50x4xf32>
    %22 = arith.addf %19, %21 : vector<50x4xf32>
    %c0_17 = arith.constant 0 : index
    %c0_18 = arith.constant 0 : index
    %23 = vector.load %arg8[%c0_17, %c0_18] : memref<50x4xf32, #tpu.memory_space<vmem>>, vector<50x4xf32>
    tpu.vector_store %arg8[%c0_17, %c0_18], %22 {strides = array<i32>} : memref<50x4xf32, #tpu.memory_space<vmem>>, vector<50x4xf32>,
    return
  }
  func.func @transform_0(%arg0: i32) -> (i32, i32) {
    %c0_i32 = arith.constant 0 : i32
    %c0_i32_0 = arith.constant 0 : i32
    return %arg0, %c0_i32 : i32, i32
  }
  func.func @transform_1(%arg0: i32) -> (i32, i32) {
    %c0_i32 = arith.constant 0 : i32
    %c0_i32_0 = arith.constant 0 : i32
    %c0_i32_1 = arith.constant 0 : i32
    return %c0_i32, %c0_i32_0 : i32, i32
  }
  func.func @transform_2(%arg0: i32) -> (i32, i32) {
    %c0_i32 = arith.constant 0 : i32
    %c0_i32_0 = arith.constant 0 : i32
    %c0_i32_1 = arith.constant 0 : i32
    return %c0_i32, %c0_i32_0 : i32, i32
  }
  func.func @transform_3(%arg0: i32) -> (i32, i32) {
    %c0_i32 = arith.constant 0 : i32
    %c0_i32_0 = arith.constant 0 : i32
    %c0_i32_1 = arith.constant 0 : i32
    return %c0_i32, %c0_i32_0 : i32, i32
  }
  func.func @transform_4(%arg0: i32) -> (i32, i32) {
    %c0_i32 = arith.constant 0 : i32
    %c0_i32_0 = arith.constant 0 : i32
    %c0_i32_1 = arith.constant 0 : i32
    return %c0_i32, %c0_i32_0 : i32, i32
  }
  func.func @transform_5(%arg0: i32) -> (i32, i32) {
    %c0_i32 = arith.constant 0 : i32
    %c0_i32_0 = arith.constant 0 : i32
    %c0_i32_1 = arith.constant 0 : i32
    return %c0_i32, %c0_i32_0 : i32, i32
  }
  func.func @transform_6(%arg0: i32) -> (i32, i32) {
    %c0_i32 = arith.constant 0 : i32
    %c0_i32_0 = arith.constant 0 : i32
    %c0_i32_1 = arith.constant 0 : i32
    return %c0_i32, %c0_i32_0 : i32, i32
  }
  func.func @transform_7(%arg0: i32) -> (i32, i32) {
    %c0_i32 = arith.constant 0 : i32
    %c0_i32_0 = arith.constant 0 : i32
    return %arg0, %c0_i32 : i32, i32
  }
}

</mosaic_0001>

<llo_original>
// kernel: content_based_forward.1
$region0: #{content_based_forward.1}
  #allocation0 [shape = 'u32[]', space=smem, size = 0x4, offset = 0x4, fixed_abs, tag = 'smem constant byte address 0x4 - core index']
  #allocation1 [shape = 'u32[144,128]{1,0:T(1,128)}', space=vmem, size = 0x12000, scoped, tag = 'internal scratch']
  %s0 = inlined_call_operand.vmem [shape: f32[50,128], index: 0, kind: input, shape index: {}]
  %s1 = inlined_call_operand.vmem [shape: bf16[128,128], index: 1, kind: input, shape index: {}]
  %s2 = inlined_call_operand.vmem [shape: f32[1,128], index: 2, kind: input, shape index: {}]
  %s3 = inlined_call_operand.vmem [shape: bf16[128,64], index: 3, kind: input, shape index: {}]
  %s4 = inlined_call_operand.vmem [shape: f32[1,64], index: 4, kind: input, shape index: {}]
  %s5 = inlined_call_operand.vmem [shape: bf16[64,4], index: 5, kind: input, shape index: {}]
  %s6 = inlined_call_operand.vmem [shape: f32[1,4], index: 6, kind: input, shape index: {}]
  %s7 = inlined_call_operand.vmem [shape: f32[50,4], index: 7, kind: output, shape index: {}]
  %s8 = sld [smem:[#allocation0]]
  $region38: #{content_based_forward.1} parent=0
    _
  %s10 = ssub.s32 1, %s8
  %s11 = scalar_select 0, %s10, %s8
  // Predicated region
  $region2: #{content_based_forward.1} parent=0 // pred_check
    _
  $region3: #{content_based_forward.1} parent=0 // pred_check_branch
    %13 = sbr.rel (0) target = $region5
  $region4: #{content_based_forward.1} parent=0 // pred_region
    _
  $region5: #{content_based_forward.1} parent=0 // pred_fallthru
    _
  // Predicated region
  $region6: #{content_based_forward.1} parent=0 // pred_check
    _
  $region7: #{content_based_forward.1} parent=0 // pred_check_branch
    %15 = sbr.rel (0) target = $region9
  $region8: #{content_based_forward.1} parent=0 // pred_region
    _
  $region9: #{content_based_forward.1} parent=0 // pred_fallthru
    _
  // Predicated region
  $region10: #{content_based_forward.1} parent=0 // pred_check
    _
  $region11: #{content_based_forward.1} parent=0 // pred_check_branch
    %17 = sbr.rel (0) target = $region13
  $region12: #{content_based_forward.1} parent=0 // pred_region
    _
  $region13: #{content_based_forward.1} parent=0 // pred_fallthru
    _
  // Predicated region
  $region14: #{content_based_forward.1} parent=0 // pred_check
    _
  $region15: #{content_based_forward.1} parent=0 // pred_check_branch
    %19 = sbr.rel (0) target = $region17
  $region16: #{content_based_forward.1} parent=0 // pred_region
    _
  $region17: #{content_based_forward.1} parent=0 // pred_fallthru
    _
  // Predicated region
  $region18: #{content_based_forward.1} parent=0 // pred_check
    _
  $region19: #{content_based_forward.1} parent=0 // pred_check_branch
    %21 = sbr.rel (0) target = $region21
  $region20: #{content_based_forward.1} parent=0 // pred_region
    _
  $region21: #{content_based_forward.1} parent=0 // pred_fallthru
    _
  // Predicated region
  $region22: #{content_based_forward.1} parent=0 // pred_check
    _
  $region23: #{content_based_forward.1} parent=0 // pred_check_branch
    %23 = sbr.rel (0) target = $region25
  $region24: #{content_based_forward.1} parent=0 // pred_region
    _
  $region25: #{content_based_forward.1} parent=0 // pred_fallthru
    _
  // Predicated region
  $region26: #{content_based_forward.1} parent=0 // pred_check
    _
  $region27: #{content_based_forward.1} parent=0 // pred_check_branch
    %25 = sbr.rel (0) target = $region29
  $region28: #{content_based_forward.1} parent=0 // pred_region
    _
  $region29: #{content_based_forward.1} parent=0 // pred_fallthru
    _
  %v27 = vld [vmem:[%s0] sm:$0xff]
  %v28 = vld [vmem:[%s0 + $0x8] sm:$0xff]
  %v29 = vld [vmem:[%s0 + $0x10] sm:$0xff]
  %v30 = vld [vmem:[%s0 + $0x18] sm:$0xff]
  %v31 = vld [vmem:[%s0 + $0x20] sm:$0xff]
  %v32 = vld [vmem:[%s0 + $0x28] sm:$0xff]
  %v33 = vld [vmem:[%s0 + $0x30] sm:$0x3]
  %v34 = vpack.c.bf16 %v28, %v27
  %v35 = vpack.c.bf16 %v30, %v29
  %v36 = vpack.c.bf16 %v32, %v31
  %v37 = vpack.c.bf16 %v33, %v33
  %v38 = vld [vmem:[%s1] sm:$0xf]
  %v39 = vld [vmem:[%s1 + $0x4] sm:$0xf]
  %v40 = vld [vmem:[%s1 + $0x8] sm:$0xf]
  %v41 = vld [vmem:[%s1 + $0xc] sm:$0xf]
  %v42 = vld [vmem:[%s1 + $0x10] sm:$0xf]
  %v43 = vld [vmem:[%s1 + $0x14] sm:$0xf]
  %v44 = vld [vmem:[%s1 + $0x18] sm:$0xf]
  %v45 = vld [vmem:[%s1 + $0x1c] sm:$0xf]
  %v46 = vld [vmem:[%s1 + $0x20] sm:$0xf]
  %v47 = vld [vmem:[%s1 + $0x24] sm:$0xf]
  %v48 = vld [vmem:[%s1 + $0x28] sm:$0xf]
  %v49 = vld [vmem:[%s1 + $0x2c] sm:$0xf]
  %v50 = vld [vmem:[%s1 + $0x30] sm:$0xf]
  %v51 = vld [vmem:[%s1 + $0x34] sm:$0xf]
  %v52 = vld [vmem:[%s1 + $0x38] sm:$0xf]
  %v53 = vld [vmem:[%s1 + $0x3c] sm:$0xf]
  %v54 = vld [vmem:[%s2] sm:$0x1]
  %v56 = vlaneseq
  %v57 = vshrl.u32 %v56, 7
  %v58 = vsub.s32 0, %v57
  %v59 = vrot.slane %v54, %v58
  %v77 = vunpack.c.l.b16 %v38
  %v78 = vunpack.c.l.b16 %v39
  %v79 = vunpack.c.l.b16 %v40
  %v80 = vunpack.c.l.b16 %v41
  %v81 = vunpack.c.l.b16 %v42
  %v82 = vunpack.c.l.b16 %v43
  %v83 = vunpack.c.l.b16 %v44
  %v84 = vunpack.c.l.b16 %v45
  %v85 = vunpack.c.l.b16 %v46
  %v86 = vunpack.c.l.b16 %v47
  %v87 = vunpack.c.l.b16 %v48
  %v88 = vunpack.c.l.b16 %v49
  %v89 = vunpack.c.l.b16 %v50
  %v90 = vunpack.c.l.b16 %v51
  %v91 = vunpack.c.l.b16 %v52
  %v92 = vunpack.c.l.b16 %v53
  %v93 = vpack.c.b16 %v78, %v77
  %v94 = vpack.c.b16 %v80, %v79
  %v95 = vpack.c.b16 %v82, %v81
  %v96 = vpack.c.b16 %v84, %v83
  %v97 = vpack.c.b16 %v86, %v85
  %v98 = vpack.c.b16 %v88, %v87
  %v99 = vpack.c.b16 %v90, %v89
  %v100 = vpack.c.b16 %v92, %v91
  %109 = vmatprep.subr.bf16.mxu0 0
  %110 = vmatpush1.bf16.msra.mxu0 %v93
  %111 = vmatprep.subr.bf16.mxu0 0
  %112 = vmatpush1.bf16.msra.mxu0 %v94
  %113 = vmatprep.subr.bf16.mxu0 0
  %114 = vmatpush1.bf16.msra.mxu0 %v95
  %115 = vmatprep.subr.bf16.mxu0 0
  %116 = vmatpush1.bf16.msra.mxu0 %v96
  %117 = vmatprep.subr.bf16.mxu0 0
  %118 = vmatpush1.bf16.msra.mxu0 %v97
  %119 = vmatprep.subr.bf16.mxu0 0
  %120 = vmatpush1.bf16.msra.mxu0 %v98
  %121 = vmatprep.subr.bf16.mxu0 0
  %122 = vmatpush1.bf16.msra.mxu0 %v99
  %123 = vmatprep.subr.bf16.mxu0 0
  %124 = vmatpush1.bf16.msra.mxu0 %v100
  %125 = vmatprep.subr.bf16.mxu0 0
  %126 = vmatpush1.bf16.msra.mxu0 0
  %127 = vmatprep.subr.bf16.mxu0 0
  %128 = vmatpush1.bf16.msra.mxu0 0
  %129 = vmatprep.subr.bf16.mxu0 0
  %130 = vmatpush1.bf16.msra.mxu0 0
  %131 = vmatprep.subr.bf16.mxu0 0
  %132 = vmatpush1.bf16.msra.mxu0 0
  %133 = vmatprep.subr.bf16.mxu0 0
  %134 = vmatpush1.bf16.msra.mxu0 0
  %135 = vmatprep.subr.bf16.mxu0 0
  %136 = vmatpush1.bf16.msra.mxu0 0
  %137 = vmatprep.subr.bf16.mxu0 0
  %138 = vmatpush1.bf16.msra.mxu0 0
  %139 = vmatprep.subr.bf16.mxu0 0
  %140 = vmatpush1.bf16.msra.mxu0 0
  %141 = vmatprep.mubr.bf16.mxu0 0
  %142 = vmatmul.mubr.bf16.gmra.mrb[0].mxu0 %v34
  %v143 = vpop.f32.mrb[0].mxu0
  %v144 = vadd.f32 %v59, %v143
  %v145 = vpop.f32.mrb[0].mxu0
  %v146 = vpop.f32.mrb[0].mxu0
  %v147 = vadd.f32 %v59, %v146
  %v148 = vpop.f32.mrb[0].mxu0
  %149 = vmatprep.mubr.bf16.mxu0 0
  %150 = vmatmul.mubr.bf16.gmra.mrb[0].mxu0 %v35
  %v151 = vpop.f32.mrb[0].mxu0
  %v152 = vadd.f32 %v59, %v151
  %v153 = vpop.f32.mrb[0].mxu0
  %v154 = vpop.f32.mrb[0].mxu0
  %v155 = vadd.f32 %v59, %v154
  %v156 = vpop.f32.mrb[0].mxu0
  %157 = vmatprep.mubr.bf16.mxu0 0
  %158 = vmatmul.mubr.bf16.gmra.mrb[0].mxu0 %v36
  %v159 = vpop.f32.mrb[0].mxu0
  %v160 = vadd.f32 %v59, %v159
  %v161 = vpop.f32.mrb[0].mxu0
  %v162 = vpop.f32.mrb[0].mxu0
  %v163 = vadd.f32 %v59, %v162
  %v164 = vpop.f32.mrb[0].mxu0
  %165 = vmatprep.mubr.bf16.mxu0 0
  %166 = vmatmul.mubr.bf16.gmra.mrb[0].mxu0 %v37
  %v167 = vpop.f32.mrb[0].mxu0
  %v168 = vadd.f32 %v59, %v167
  %v169 = vpop.f32.mrb[0].mxu0
  %v170 = vpop.f32.mrb[0].mxu0
  %v171 = vpop.f32.mrb[0].mxu0
  %172 = vdwg.mxu0
  %v173 = vmax.f32 %v144, 0.0
  %v174 = vmax.f32 %v147, 0.0
  %v175 = vmax.f32 %v152, 0.0
  %v176 = vmax.f32 %v155, 0.0
  %v177 = vmax.f32 %v160, 0.0
  %v178 = vmax.f32 %v163, 0.0
  %v179 = vmax.f32 %v168, 0.0
  %v180 = vpack.c.bf16 %v174, %v173
  %v181 = vpack.c.bf16 %v176, %v175
  %v182 = vpack.c.bf16 %v178, %v177
  %v183 = vpack.c.bf16 %v179, %v179
  %v184 = vld [vmem:[%s3] sm:$0xf]
  %v185 = vld [vmem:[%s3 + $0x4] sm:$0xf]
  %v186 = vld [vmem:[%s3 + $0x8] sm:$0xf]
  %v187 = vld [vmem:[%s3 + $0xc] sm:$0xf]
  %v188 = vld [vmem:[%s3 + $0x10] sm:$0xf]
  %v189 = vld [vmem:[%s3 + $0x14] sm:$0xf]
  %v190 = vld [vmem:[%s3 + $0x18] sm:$0xf]
  %v191 = vld [vmem:[%s3 + $0x1c] sm:$0xf]
  %v192 = vld [vmem:[%s3 + $0x20] sm:$0xf]
  %v193 = vld [vmem:[%s3 + $0x24] sm:$0xf]
  %v194 = vld [vmem:[%s3 + $0x28] sm:$0xf]
  %v195 = vld [vmem:[%s3 + $0x2c] sm:$0xf]
  %v196 = vld [vmem:[%s3 + $0x30] sm:$0xf]
  %v197 = vld [vmem:[%s3 + $0x34] sm:$0xf]
  %v198 = vld [vmem:[%s3 + $0x38] sm:$0xf]
  %v199 = vld [vmem:[%s3 + $0x3c] sm:$0xf]
  %v200 = vld [vmem:[%s4] sm:$0x1]
  %v202 = vlaneseq
  %v203 = vshrl.u32 %v202, 7
  %v204 = vsub.s32 0, %v203
  %v205 = vrot.slane %v200, %v204
  %v223 = vunpack.c.l.b16 %v184
  %v224 = vunpack.c.l.b16 %v185
  %v225 = vunpack.c.l.b16 %v186
  %v226 = vunpack.c.l.b16 %v187
  %v227 = vunpack.c.l.b16 %v188
  %v228 = vunpack.c.l.b16 %v189
  %v229 = vunpack.c.l.b16 %v190
  %v230 = vunpack.c.l.b16 %v191
  %v231 = vunpack.c.l.b16 %v192
  %v232 = vunpack.c.l.b16 %v193
  %v233 = vunpack.c.l.b16 %v194
  %v234 = vunpack.c.l.b16 %v195
  %v235 = vunpack.c.l.b16 %v196
  %v236 = vunpack.c.l.b16 %v197
  %v237 = vunpack.c.l.b16 %v198
  %v238 = vunpack.c.l.b16 %v199
  %v239 = vpack.c.b16 %v224, %v223
  %v240 = vpack.c.b16 %v226, %v225
  %v241 = vpack.c.b16 %v228, %v227
  %v242 = vpack.c.b16 %v230, %v229
  %v243 = vpack.c.b16 %v232, %v231
  %v244 = vpack.c.b16 %v234, %v233
  %v245 = vpack.c.b16 %v236, %v235
  %v246 = vpack.c.b16 %v238, %v237
  %255 = vmatprep.subr.bf16.mxu0 0
  %256 = vmatpush1.bf16.msra.mxu0 %v239
  %257 = vmatprep.subr.bf16.mxu0 0
  %258 = vmatpush1.bf16.msra.mxu0 %v240
  %259 = vmatprep.subr.bf16.mxu0 0
  %260 = vmatpush1.bf16.msra.mxu0 %v241
  %261 = vmatprep.subr.bf16.mxu0 0
  %262 = vmatpush1.bf16.msra.mxu0 %v242
  %263 = vmatprep.subr.bf16.mxu0 0
  %264 = vmatpush1.bf16.msra.mxu0 %v243
  %265 = vmatprep.subr.bf16.mxu0 0
  %266 = vmatpush1.bf16.msra.mxu0 %v244
  %267 = vmatprep.subr.bf16.mxu0 0
  %268 = vmatpush1.bf16.msra.mxu0 %v245
  %269 = vmatprep.subr.bf16.mxu0 0
  %270 = vmatpush1.bf16.msra.mxu0 %v246
  %271 = vmatprep.subr.bf16.mxu0 0
  %272 = vmatpush1.bf16.msra.mxu0 0
  %273 = vmatprep.subr.bf16.mxu0 0
  %274 = vmatpush1.bf16.msra.mxu0 0
  %275 = vmatprep.subr.bf16.mxu0 0
  %276 = vmatpush1.bf16.msra.mxu0 0
  %277 = vmatprep.subr.bf16.mxu0 0
  %278 = vmatpush1.bf16.msra.mxu0 0
  %279 = vmatprep.subr.bf16.mxu0 0
  %280 = vmatpush1.bf16.msra.mxu0 0
  %281 = vmatprep.subr.bf16.mxu0 0
  %282 = vmatpush1.bf16.msra.mxu0 0
  %283 = vmatprep.subr.bf16.mxu0 0
  %284 = vmatpush1.bf16.msra.mxu0 0
  %285 = vmatprep.subr.bf16.mxu0 0
  %286 = vmatpush1.bf16.msra.mxu0 0
  %287 = vmatprep.mubr.bf16.mxu0 0
  %288 = vmatmul.mubr.bf16.gmra.mrb[0].mxu0 %v180
  %v289 = vpop.f32.mrb[0].mxu0
  %v290 = vadd.f32 %v205, %v289
  %v291 = vpop.f32.mrb[0].mxu0
  %v292 = vpop.f32.mrb[0].mxu0
  %v293 = vadd.f32 %v205, %v292
  %v294 = vpop.f32.mrb[0].mxu0
  %295 = vmatprep.mubr.bf16.mxu0 0
  %296 = vmatmul.mubr.bf16.gmra.mrb[0].mxu0 %v181
  %v297 = vpop.f32.mrb[0].mxu0
  %v298 = vadd.f32 %v205, %v297
  %v299 = vpop.f32.mrb[0].mxu0
  %v300 = vpop.f32.mrb[0].mxu0
  %v301 = vadd.f32 %v205, %v300
  %v302 = vpop.f32.mrb[0].mxu0
  %303 = vmatprep.mubr.bf16.mxu0 0
  %304 = vmatmul.mubr.bf16.gmra.mrb[0].mxu0 %v182
  %v305 = vpop.f32.mrb[0].mxu0
  %v306 = vadd.f32 %v205, %v305
  %v307 = vpop.f32.mrb[0].mxu0
  %v308 = vpop.f32.mrb[0].mxu0
  %v309 = vadd.f32 %v205, %v308
  %v310 = vpop.f32.mrb[0].mxu0
  %311 = vmatprep.mubr.bf16.mxu0 0
  %312 = vmatmul.mubr.bf16.gmra.mrb[0].mxu0 %v183
  %v313 = vpop.f32.mrb[0].mxu0
  %v314 = vadd.f32 %v205, %v313
  %v315 = vpop.f32.mrb[0].mxu0
  %v316 = vpop.f32.mrb[0].mxu0
  %v317 = vpop.f32.mrb[0].mxu0
  %318 = vdwg.mxu0
  %v319 = vmax.f32 %v290, 0.0
  %v320 = vmax.f32 %v293, 0.0
  %v321 = vmax.f32 %v298, 0.0
  %v322 = vmax.f32 %v301, 0.0
  %v323 = vmax.f32 %v306, 0.0
  %v324 = vmax.f32 %v309, 0.0
  %v325 = vmax.f32 %v314, 0.0
  %v326 = vpack.c.bf16 %v320, %v319
  %v327 = vpack.c.bf16 %v322, %v321
  %v328 = vpack.c.bf16 %v324, %v323
  %v329 = vpack.c.bf16 %v325, %v325
  %v330 = vld [vmem:[%s5] sm:$0xf]
  %v331 = vld [vmem:[%s5 + $0x4] sm:$0xf]
  %v332 = vld [vmem:[%s5 + $0x8] sm:$0xf]
  %v333 = vld [vmem:[%s5 + $0xc] sm:$0xf]
  %v334 = vld [vmem:[%s5 + $0x10] sm:$0xf]
  %v335 = vld [vmem:[%s5 + $0x14] sm:$0xf]
  %v336 = vld [vmem:[%s5 + $0x18] sm:$0xf]
  %v337 = vld [vmem:[%s5 + $0x1c] sm:$0xf]
  %v338 = vld [vmem:[%s6] sm:$0x1]
  %v340 = vlaneseq
  %v341 = vshrl.u32 %v340, 7
  %v342 = vsub.s32 0, %v341
  %v343 = vrot.slane %v338, %v342
  %v353 = vunpack.c.l.b16 %v330
  %v354 = vunpack.c.l.b16 %v331
  %v355 = vunpack.c.l.b16 %v332
  %v356 = vunpack.c.l.b16 %v333
  %v357 = vunpack.c.l.b16 %v334
  %v358 = vunpack.c.l.b16 %v335
  %v359 = vunpack.c.l.b16 %v336
  %v360 = vunpack.c.l.b16 %v337
  %v361 = vpack.c.b16 %v354, %v353
  %v362 = vpack.c.b16 %v356, %v355
  %v363 = vpack.c.b16 %v358, %v357
  %v364 = vpack.c.b16 %v360, %v359
  %vm369 = vcmask 523264
  %v371 = vsel %vm369, %v326, 0
  %v374 = vsel %vm369, %v327, 0
  %v377 = vsel %vm369, %v328, 0
  %v380 = vsel %vm369, %v329, 0
  %382 = vmatprep.subr.bf16.mxu0 0
  %383 = vmatpush1.bf16.msra.mxu0 %v361
  %384 = vmatprep.subr.bf16.mxu0 0
  %385 = vmatpush1.bf16.msra.mxu0 %v362
  %386 = vmatprep.subr.bf16.mxu0 0
  %387 = vmatpush1.bf16.msra.mxu0 %v363
  %388 = vmatprep.subr.bf16.mxu0 0
  %389 = vmatpush1.bf16.msra.mxu0 %v364
  %390 = vmatprep.subr.bf16.mxu0 0
  %391 = vmatpush1.bf16.msra.mxu0 0
  %392 = vmatprep.subr.bf16.mxu0 0
  %393 = vmatpush1.bf16.msra.mxu0 0
  %394 = vmatprep.subr.bf16.mxu0 0
  %395 = vmatpush1.bf16.msra.mxu0 0
  %396 = vmatprep.subr.bf16.mxu0 0
  %397 = vmatpush1.bf16.msra.mxu0 0
  %398 = vmatprep.subr.bf16.mxu0 0
  %399 = vmatpush1.bf16.msra.mxu0 0
  %400 = vmatprep.subr.bf16.mxu0 0
  %401 = vmatpush1.bf16.msra.mxu0 0
  %402 = vmatprep.subr.bf16.mxu0 0
  %403 = vmatpush1.bf16.msra.mxu0 0
  %404 = vmatprep.subr.bf16.mxu0 0
  %405 = vmatpush1.bf16.msra.mxu0 0
  %406 = vmatprep.subr.bf16.mxu0 0
  %407 = vmatpush1.bf16.msra.mxu0 0
  %408 = vmatprep.subr.bf16.mxu0 0
  %409 = vmatpush1.bf16.msra.mxu0 0
  %410 = vmatprep.subr.bf16.mxu0 0
  %411 = vmatpush1.bf16.msra.mxu0 0
  %412 = vmatprep.subr.bf16.mxu0 0
  %413 = vmatpush1.bf16.msra.mxu0 0
  %414 = vmatprep.mubr.bf16.mxu0 0
  %415 = vmatmul.mubr.bf16.gmra.mrb[0].mxu0 %v371
  %v416 = vpop.f32.mrb[0].mxu0
  %v417 = vadd.f32 %v343, %v416
  %v418 = vpop.f32.mrb[0].mxu0
  %v419 = vpop.f32.mrb[0].mxu0
  %v420 = vadd.f32 %v343, %v419
  %v421 = vpop.f32.mrb[0].mxu0
  %422 = vmatprep.mubr.bf16.mxu0 0
  %423 = vmatmul.mubr.bf16.gmra.mrb[0].mxu0 %v374
  %v424 = vpop.f32.mrb[0].mxu0
  %v425 = vadd.f32 %v343, %v424
  %v426 = vpop.f32.mrb[0].mxu0
  %v427 = vpop.f32.mrb[0].mxu0
  %v428 = vadd.f32 %v343, %v427
  %v429 = vpop.f32.mrb[0].mxu0
  %430 = vmatprep.mubr.bf16.mxu0 0
  %431 = vmatmul.mubr.bf16.gmra.mrb[0].mxu0 %v377
  %v432 = vpop.f32.mrb[0].mxu0
  %v433 = vadd.f32 %v343, %v432
  %v434 = vpop.f32.mrb[0].mxu0
  %v435 = vpop.f32.mrb[0].mxu0
  %v436 = vadd.f32 %v343, %v435
  %v437 = vpop.f32.mrb[0].mxu0
  %438 = vmatprep.mubr.bf16.mxu0 0
  %439 = vmatmul.mubr.bf16.gmra.mrb[0].mxu0 %v380
  %v440 = vpop.f32.mrb[0].mxu0
  %v441 = vadd.f32 %v343, %v440
  %v442 = vpop.f32.mrb[0].mxu0
  %v443 = vpop.f32.mrb[0].mxu0
  %v444 = vpop.f32.mrb[0].mxu0
  %445 = vdwg.mxu0
  %vm446 = vcmask 31744
  %447 = vst.msk [vmem:[%s7] sm:$0xff] %vm446, %v417
  %448 = vst.msk [vmem:[%s7 + $0x8] sm:$0xff] %vm446, %v420
  %449 = vst.msk [vmem:[%s7 + $0x10] sm:$0xff] %vm446, %v425
  %450 = vst.msk [vmem:[%s7 + $0x18] sm:$0xff] %vm446, %v428
  %451 = vst.msk [vmem:[%s7 + $0x20] sm:$0xff] %vm446, %v433
  %452 = vst.msk [vmem:[%s7 + $0x28] sm:$0xff] %vm446, %v436
  %vm453 = vcmask 25600
  %454 = vst.msk [vmem:[%s7 + $0x30] sm:$0x3] %vm453, %v441
  // Predicated region
  $region30: #{content_based_forward.1} parent=0 // pred_check
    _
  $region31: #{content_based_forward.1} parent=0 // pred_check_branch
    %456 = sbr.rel (0) target = $region33
  $region32: #{content_based_forward.1} parent=0 // pred_region
    _
  $region33: #{content_based_forward.1} parent=0 // pred_fallthru
    _
  // Predicated region
  $region34: #{content_based_forward.1} parent=0 // pred_check
    _
  $region35: #{content_based_forward.1} parent=0 // pred_check_branch
    %458 = sbr.rel (0) target = $region37
  $region36: #{content_based_forward.1} parent=0 // pred_region
    _
  $region37: #{content_based_forward.1} parent=0 // pred_fallthru
    _

</llo_original>
